<compile_context>
chip_gen: v7x
topology: tpu7x:2x2x1
jax: 0.10.0
libtpu: 0.0.40
codegen_flags: <defaults>
</compile_context>

<pallas_src>
import jax
import jax.numpy as jnp
from jax import lax
from jax.experimental import pallas as pl
from jax.experimental.pallas import tpu as pltpu

_LANES = 128


def _tpu_config():
    """Per-generation tile target (bytes per input block), VMEM cap, core split."""
    try:
        kind = jax.devices()[0].device_kind.lower()
    except Exception:
        kind = ""
    if "v7" in kind:
        # 3.2 TB/s HBM per TC, 64 MiB VMEM, 2 TensorCores/chip.
        return dict(target_bytes=8 << 20, vmem_cap=48 << 20, core_split=2)
    if "v5 lite" in kind or "v5e" in kind or "v5lite" in kind:
        # ~820 GB/s HBM: 2 MiB tiles already hide the per-step overhead.
        return dict(target_bytes=2 << 20, vmem_cap=96 << 20, core_split=1)
    # v6e / default.
    return dict(target_bytes=4 << 20, vmem_cap=96 << 20, core_split=1)


def _pair_ssd(s3, t3, *, rows, tile_r, kd, n_split, vmem_limit):
    """Per-sample sum of squared differences for one (student, teacher) pair.

    s3, t3: (bsz, rows, 128) feature slabs (free reshapes of the originals).
    Returns (bsz,) float32 sums (divide by the true D outside).
    """
    bsz = s3.shape[0]
    kd2 = -(-kd // n_split)                       # row-tiles per core
    needs_mask = n_split * kd2 * tile_r > rows    # partial / duplicated tiles
    grouped = (tile_r % 8 == 0)
    acc_rows = 8 if grouped else 1

    def kernel(s_ref, t_ref, o_ref):
        c = pl.program_id(0)                      # core-split index (parallel)
        k = pl.program_id(1)                      # row-tile index (arbitrary)

        @pl.when(k == 0)
        def _init():
            o_ref[...] = jnp.zeros_like(o_ref)

        s = s_ref[...].astype(jnp.float32)        # (bsz, tile_r, 128)
        t = t_ref[...].astype(jnp.float32)
        d = s - t
        dd = d * d                                # VPU

        if needs_mask:
            # Zero rows past the end of the feature: covers the partial last
            # tile and the clamped duplicate tile a core gets when kd is odd.
            base = (c * kd2 + k) * tile_r
            rix = lax.broadcasted_iota(jnp.int32, dd.shape, 1)
            dd = jnp.where(base + rix < rows, dd, 0.0)

        if grouped:
            # Layout-preserving regroup of the sublane axis; the sum over row
            # groups is pure vreg adds (no XLU cross-lane/sublane reduce).
            part = dd.reshape(bsz, tile_r // 8, 8, _LANES).sum(axis=1)
        else:
            # Tiny single-tile fallback (rows < 8 and not a multiple of 8).
            part = dd.sum(axis=1, keepdims=True)
        o_ref[...] += part[None]                  # (1, bsz, acc_rows, 128)

    last_blk = kd - 1
    in_map = lambda c, k: (0, jnp.minimum(c * kd2 + k, last_blk), 0)

    out = pl.pallas_call(
        kernel,
        out_shape=jax.ShapeDtypeStruct((n_split, bsz, acc_rows, _LANES),
                                       jnp.float32),
        grid=(n_split, kd2),
        in_specs=[
            pl.BlockSpec((bsz, tile_r, _LANES), in_map),
            pl.BlockSpec((bsz, tile_r, _LANES), in_map),
        ],
        out_specs=pl.BlockSpec((1, bsz, acc_rows, _LANES),
                               lambda c, k: (c, 0, 0, 0)),
        compiler_params=pltpu.CompilerParams(
            dimension_semantics=("parallel", "arbitrary"),
            vmem_limit_bytes=vmem_limit),
    )(s3, t3)
    return out.sum(axis=(0, 2, 3))                # (bsz,) f32


def semckd_loss(s_value, f_target, weight):
    """s_value, f_target: lists of lists [num_stu][num_tea] of (bsz, C, H, W)
    (per-pair spatial shapes may differ).  weight: (bsz, num_stu, num_tea)."""
    bsz, num_stu, num_tea = weight.shape
    cfg = _tpu_config()

    ind_cols = []
    for i in range(num_stu):
        per_tea = []
        for j in range(num_tea):
            s = s_value[i][j].reshape(bsz, -1)
            t = f_target[i][j].reshape(bsz, -1)
            assert s.shape == t.shape
            d_true = s.shape[1]

            d_pad = -(-d_true // _LANES) * _LANES
            if d_pad != d_true:
                # Rare case: flattened size not a multiple of 128.  Pad this
                # pair only; zeros in both s and t contribute 0 to the SSD.
                s = jnp.pad(s, ((0, 0), (0, d_pad - d_true)))
                t = jnp.pad(t, ((0, 0), (0, d_pad - d_true)))
            rows = d_pad // _LANES
            s3 = s.reshape(bsz, rows, _LANES)     # free reshape (contiguous)
            t3 = t.reshape(bsz, rows, _LANES)

            itemsize = jnp.dtype(s3.dtype).itemsize
            budget = max(8, (cfg["target_bytes"]
                             // (bsz * _LANES * itemsize)) // 8 * 8)
            tile_r = rows if rows <= budget else budget
            kd = -(-rows // tile_r)
            n_split = cfg["core_split"] if kd >= 2 else 1

            block_bytes = bsz * tile_r * _LANES * itemsize
            vmem_limit = int(min(max(4 * block_bytes + (2 << 20), 16 << 20),
                                 cfg["vmem_cap"]))

            ssd = _pair_ssd(s3, t3, rows=rows, tile_r=tile_r, kd=kd,
                            n_split=n_split, vmem_limit=vmem_limit)
            per_tea.append(ssd / float(d_true))   # per-sample MSE, (bsz,)
        ind_cols.append(jnp.stack(per_tea, axis=-1))           # (bsz, num_tea)
    ind_loss = jnp.stack(ind_cols, axis=1)                     # (bsz, S, T)
    return (weight.astype(jnp.float32) * ind_loss).sum() / (1.0 * bsz * num_stu)


def semckd_loss_ref(s_value, f_target, weight):
    """Pure-JAX reference mirroring the PyTorch module."""
    bsz, num_stu, num_tea = weight.shape
    ind_loss = jnp.zeros((bsz, num_stu, num_tea), jnp.float32)
    for i in range(num_stu):
        for j in range(num_tea):
            d = (s_value[i][j] - f_target[i][j]).reshape(bsz, -1)
            ind_loss = ind_loss.at[:, i, j].set(jnp.mean(d * d, axis=-1))
    return (weight * ind_loss).sum() / (1.0 * bsz * num_stu)


if __name__ == "__main__":
    bsz, num_stu, num_tea = 2, 3, 3
    C, H, W = 4, 16, 16

    key = jax.random.PRNGKey(0)
    keys = jax.random.split(key, 2 * num_stu * num_tea + 1)

    s_value = [[jax.random.normal(keys[i * num_tea + j], (bsz, C, H, W),
                                  dtype=jnp.float32)
                for j in range(num_tea)] for i in range(num_stu)]
    f_target = [[jax.random.normal(keys[num_stu * num_tea + i * num_tea + j],
                                   (bsz, C, H, W), dtype=jnp.float32)
                 for j in range(num_tea)] for i in range(num_stu)]
    # attention-like weights (rows sum to 1 over teachers, as in SemCKD)
    weight = jax.nn.softmax(
        jax.random.normal(keys[-1], (bsz, num_stu, num_tea), dtype=jnp.float32),
        axis=-1)

    loss = jax.block_until_ready(semckd_loss(s_value, f_target, weight))
    ref = jax.block_until_ready(semckd_loss_ref(s_value, f_target, weight))

    assert jnp.allclose(loss, ref, rtol=1e-5, atol=1e-5), (loss, ref)
    print("KERNEL_OK")
</pallas_src>

<mosaic_0001>
module attributes {stable_mosaic.version = 11 : i64} {
  func.func @kernel(%arg0: i32, %arg1: i32, %arg2: memref<2x8x128xf32, #tpu.memory_space<vmem>>, %arg3: memref<2x8x128xf32, #tpu.memory_space<vmem>>, %arg4: memref<1x2x8x128xf32, #tpu.memory_space<vmem>>) attributes {dimension_semantics = [#tpu.dimension_semantics<parallel>, #tpu.dimension_semantics<arbitrary>], iteration_bounds = array<i64: 1, 1>, scalar_prefetch = 0 : i64, scratch_operands = 0 : i64, tpu.core_type = #tpu.core_type<tc>, window_params = [{transform_indices = @transform_0, window_bounds = array<i64: 2, 8, 128>}, {transform_indices = @transform_1, window_bounds = array<i64: 2, 8, 128>}, {transform_indices = @transform_2, window_bounds = array<i64: 1, 2, 8, 128>}]} {
    %c0_i32 = arith.constant 0 : i32
    %0 = arith.cmpi eq, %arg1, %c0_i32 : i32
    %1 = arith.extui %0 : i1 to i32
    %c0_i32_0 = arith.constant 0 : i32
    %2 = arith.cmpi ne, %1, %c0_i32_0 : i32
    scf.if %2 {
      %cst_14 = arith.constant 0.000000e+00 : f32
      %13 = vector.broadcast %cst_14 : f32 to vector<1x2x8x128xf32>
      %c0_15 = arith.constant 0 : index
      %c0_16 = arith.constant 0 : index
      %c0_17 = arith.constant 0 : index
      %c0_18 = arith.constant 0 : index
      %14 = vector.load %arg4[%c0_15, %c0_16, %c0_17, %c0_18] : memref<1x2x8x128xf32, #tpu.memory_space<vmem>>, vector<1x2x8x128xf32>
      tpu.vector_store %arg4[%c0_15, %c0_16, %c0_17, %c0_18], %13 {strides = array<i32>} : memref<1x2x8x128xf32, #tpu.memory_space<vmem>>, vector<1x2x8x128xf32>,
    } else {
    }
    %c0 = arith.constant 0 : index
    %c0_1 = arith.constant 0 : index
    %c0_2 = arith.constant 0 : index
    %3 = vector.load %arg2[%c0, %c0_1, %c0_2] : memref<2x8x128xf32, #tpu.memory_space<vmem>>, vector<2x8x128xf32>
    %c0_3 = arith.constant 0 : index
    %c0_4 = arith.constant 0 : index
    %c0_5 = arith.constant 0 : index
    %4 = vector.load %arg3[%c0_3, %c0_4, %c0_5] : memref<2x8x128xf32, #tpu.memory_space<vmem>>, vector<2x8x128xf32>
    %5 = arith.subf %3, %4 : vector<2x8x128xf32>
    %6 = arith.mulf %5, %5 : vector<2x8x128xf32>
    %7 = vector.shape_cast %6 : vector<2x8x128xf32> to vector<2x1x8x128xf32>
    %cst = arith.constant dense<0.000000e+00> : vector<2x8x128xf32>
    %8 = vector.multi_reduction <add>, %7, %cst [1] : vector<2x1x8x128xf32> to vector<2x8x128xf32>
    %c0_6 = arith.constant 0 : index
    %c0_7 = arith.constant 0 : index
    %c0_8 = arith.constant 0 : index
    %c0_9 = arith.constant 0 : index
    %9 = vector.load %arg4[%c0_6, %c0_7, %c0_8, %c0_9] : memref<1x2x8x128xf32, #tpu.memory_space<vmem>>, vector<1x2x8x128xf32>
    %10 = vector.shape_cast %8 : vector<2x8x128xf32> to vector<1x2x8x128xf32>
    %11 = arith.addf %9, %10 : vector<1x2x8x128xf32>
    %c0_10 = arith.constant 0 : index
    %c0_11 = arith.constant 0 : index
    %c0_12 = arith.constant 0 : index
    %c0_13 = arith.constant 0 : index
    %12 = vector.load %arg4[%c0_10, %c0_11, %c0_12, %c0_13] : memref<1x2x8x128xf32, #tpu.memory_space<vmem>>, vector<1x2x8x128xf32>
    tpu.vector_store %arg4[%c0_10, %c0_11, %c0_12, %c0_13], %11 {strides = array<i32>} : memref<1x2x8x128xf32, #tpu.memory_space<vmem>>, vector<1x2x8x128xf32>,
    return
  }
  func.func @transform_0(%arg0: i32, %arg1: i32) -> (i32, i32, i32) {
    %c1_i32 = arith.constant 1 : i32
    %0 = arith.muli %arg0, %c1_i32 : i32
    %1 = arith.addi %0, %arg1 : i32
    %c0_i32 = arith.constant 0 : i32
    %2 = arith.minsi %1, %c0_i32 : i32
    %c0_i32_0 = arith.constant 0 : i32
    %c0_i32_1 = arith.constant 0 : i32
    %c0_i32_2 = arith.constant 0 : i32
    return %c0_i32_0, %2, %c0_i32_1 : i32, i32, i32
  }
  func.func @transform_1(%arg0: i32, %arg1: i32) -> (i32, i32, i32) {
    %c1_i32 = arith.constant 1 : i32
    %0 = arith.muli %arg0, %c1_i32 : i32
    %1 = arith.addi %0, %arg1 : i32
    %c0_i32 = arith.constant 0 : i32
    %2 = arith.minsi %1, %c0_i32 : i32
    %c0_i32_0 = arith.constant 0 : i32
    %c0_i32_1 = arith.constant 0 : i32
    %c0_i32_2 = arith.constant 0 : i32
    return %c0_i32_0, %2, %c0_i32_1 : i32, i32, i32
  }
  func.func @transform_2(%arg0: i32, %arg1: i32) -> (i32, i32, i32, i32) {
    %c0_i32 = arith.constant 0 : i32
    %c0_i32_0 = arith.constant 0 : i32
    %c0_i32_1 = arith.constant 0 : i32
    %c0_i32_2 = arith.constant 0 : i32
    return %arg0, %c0_i32, %c0_i32_0, %c0_i32_1 : i32, i32, i32, i32
  }
}

</mosaic_0001>

<llo_original>
// kernel: tpu_custom_call.1
$region0: #{tpu_custom_call.1}
  #allocation0 [shape = 'u32[]', space=smem, size = 0x4, offset = 0x4, fixed_abs, tag = 'smem constant byte address 0x4 - core index']
  #allocation1 [shape = 'u32[144,128]{1,0:T(1,128)}', space=vmem, size = 0x12000, scoped, tag = 'internal scratch']
  %s0 = inlined_call_operand.hbm [shape: f32[2,8,128], index: 0, kind: input, shape index: {}]
  %s1 = inlined_call_operand.hbm [shape: f32[2,8,128], index: 1, kind: input, shape index: {}]
  %s2 = inlined_call_operand.hbm [shape: f32[1,2,8,128], index: 2, kind: output, shape index: {}]
  %s3 = sld [smem:[#allocation0]]
  $region30: #{tpu_custom_call.1} parent=0
    _
  %s5 = ssub.s32 1, %s3
  %s6 = scalar_select 0, %s5, %s3
  $region1: #{tpu_custom_call.1} parent=0
    #allocation2 [shape = 'u8[8192]{0}', space=vmem, size = 0x2000, scoped, tag = 'input window, operand 0, single buffered']
    #allocation3 [shape = 's32[1]{0}', space=sflag, size = 0x4, scoped, tag = 'scoped memory for tpu_custom_call.1']
    #allocation4 [shape = 's32[1]{0}', space=sflag, size = 0x4, scoped, tag = 'scoped memory for tpu_custom_call.1']
    #allocation5 [shape = 'u8[8192]{0}', space=vmem, size = 0x2000, scoped, tag = 'input window, operand 1, single buffered']
    #allocation6 [shape = 's32[1]{0}', space=sflag, size = 0x4, scoped, tag = 'scoped memory for tpu_custom_call.1']
    #allocation7 [shape = 'u8[8192]{0}', space=vmem, size = 0x2000, scoped, tag = 'output window, operand 0, single buffered']
    %7 = vsyncpa [#allocation3], 0
    %8 = vsyncpa [#allocation6], 0
    %9 = vsyncpa [#allocation4], 0
    // Predicated region
    $region2: #{tpu_custom_call.1} parent=1 // pred_check
      _
    $region3: #{tpu_custom_call.1} parent=1 // pred_check_branch
      %11 = sbr.rel (0) target = $region5
    $region4: #{tpu_custom_call.1} parent=1 // pred_region
      %s12 = sadd.s32 0, 0
      %p13 = scmp.lt.s32.totalorder %s12, 0
      %s14 = scalar_select %p13, %s12, 0
      %s16 = ssub.s32 256, 256
      %17 = vsyncadd [#allocation3], %s16
      %s18 = smul.addr %s14, 128
      %s19 = scalar_lea.hbm %s0, %s18
      %s20 = sshll.u32 [#allocation2], 4
      %s21 = int_to_ptr.vmem [resolvable:$true] %s20
      %26 = dma.hbm_to_vmem [thread:$0]  %s19, 256, %s21, [#allocation3], 128, 128, 8
    $region5: #{tpu_custom_call.1} parent=1 // pred_fallthru
      _
    // Predicated region
    $region6: #{tpu_custom_call.1} parent=1 // pred_check
      _
    $region7: #{tpu_custom_call.1} parent=1 // pred_check_branch
      %28 = sbr.rel (0) target = $region9
    $region8: #{tpu_custom_call.1} parent=1 // pred_region
      %s29 = sadd.s32 0, 0
      %p30 = scmp.lt.s32.totalorder %s29, 0
      %s31 = scalar_select %p30, %s29, 0
      %s33 = ssub.s32 256, 256
      %34 = vsyncadd [#allocation6], %s33
      %s35 = smul.addr %s31, 128
      %s36 = scalar_lea.hbm %s1, %s35
      %s37 = sshll.u32 [#allocation5], 4
      %s38 = int_to_ptr.vmem [resolvable:$true] %s37
      %43 = dma.hbm_to_vmem [thread:$0]  %s36, 256, %s38, [#allocation6], 128, 128, 8
    $region9: #{tpu_custom_call.1} parent=1 // pred_fallthru
      _
    // Predicated region
    $region10: #{tpu_custom_call.1} parent=1 // pred_check
      _
    $region11: #{tpu_custom_call.1} parent=1 // pred_check_branch
      %45 = sbr.rel (0) target = $region13
    $region12: #{tpu_custom_call.1} parent=1 // pred_region
      %46 = dma.done [#allocation3], 256
    $region13: #{tpu_custom_call.1} parent=1 // pred_fallthru
      _
    // Predicated region
    $region14: #{tpu_custom_call.1} parent=1 // pred_check
      _
    $region15: #{tpu_custom_call.1} parent=1 // pred_check_branch
      %48 = sbr.rel (0) target = $region17
    $region16: #{tpu_custom_call.1} parent=1 // pred_region
      %49 = dma.done [#allocation6], 256
    $region17: #{tpu_custom_call.1} parent=1 // pred_fallthru
      _
    %s50 = sadd.s32 0, 0
    %p51 = scmp.lt.s32.totalorder %s50, 0
    %s52 = scalar_select %p51, %s50, 0
    %s53 = sadd.s32 0, 0
    %p54 = scmp.lt.s32.totalorder %s53, 0
    %s55 = scalar_select %p54, %s53, 0
    %p56 = scmp.eq.s32.totalorder 0, 0
    // Predicated region
    $region18: #{tpu_custom_call.1} parent=1 // pred_check
      %p57 = pneg %p56
    $region19: #{tpu_custom_call.1} parent=1 // pred_check_branch
      %59 = sbr.rel (%p57) target = $region21
    $region20: #{tpu_custom_call.1} parent=1 // pred_region
      %60 = vst [vmem:[#allocation7] sm:$0xff] 0.0
      %61 = vst [vmem:[#allocation7 + $0x8] sm:$0xff] 0.0
    $region21: #{tpu_custom_call.1} parent=1 // pred_fallthru
      _
    %v62 = vld [vmem:[#allocation2] sm:$0xff]
    %v63 = vld [vmem:[#allocation2 + $0x8] sm:$0xff]
    %v64 = vld [vmem:[#allocation5] sm:$0xff]
    %v65 = vld [vmem:[#allocation5 + $0x8] sm:$0xff]
    %v66 = vsub.f32 %v62, %v64
    %v67 = vsub.f32 %v63, %v65
    %v68 = vmul.f32 %v66, %v66
    %v69 = vmul.f32 %v67, %v67
    %v70 = vadd.f32 %v68, 0.0
    %v71 = vadd.f32 %v69, 0.0
    %v72 = vld [vmem:[#allocation7] sm:$0xff]
    %v73 = vld [vmem:[#allocation7 + $0x8] sm:$0xff]
    %v74 = vadd.f32 %v72, %v70
    %v75 = vadd.f32 %v73, %v71
    %76 = vst [vmem:[#allocation7] sm:$0xff] %v74
    %77 = vst [vmem:[#allocation7 + $0x8] sm:$0xff] %v75
    // Predicated region
    $region22: #{tpu_custom_call.1} parent=1 // pred_check
      _
    $region23: #{tpu_custom_call.1} parent=1 // pred_check_branch
      %79 = sbr.rel (0) target = $region25
    $region24: #{tpu_custom_call.1} parent=1 // pred_region
      %s81 = ssub.s32 256, 256
      %82 = vsyncadd [#allocation4], %s81
      %s83 = sshll.u32 [#allocation7], 4
      %s84 = int_to_ptr.vmem [resolvable:$true] %s83
      %89 = dma.vmem_to_hbm [thread:$0]  %s84, 256, %s2, [#allocation4], 128, 128, 8
    $region25: #{tpu_custom_call.1} parent=1 // pred_fallthru
      _
    // Predicated region
    $region26: #{tpu_custom_call.1} parent=1 // pred_check
      _
    $region27: #{tpu_custom_call.1} parent=1 // pred_check_branch
      %91 = sbr.rel (0) target = $region29
    $region28: #{tpu_custom_call.1} parent=1 // pred_region
      %92 = dma.done [#allocation4], 256
    $region29: #{tpu_custom_call.1} parent=1 // pred_fallthru
      _
    %93 = vsyncpa [#allocation3], 1
    %94 = vsyncpa [#allocation6], 1
    %95 = vsyncpa [#allocation4], 1

</llo_original>
